<compile_context>
chip_gen: v6e
topology: v6e:2x2x1
jax: 0.10.0
libtpu: 0.0.40
codegen_flags: <defaults>
</compile_context>

<pallas_src>
import functools

import jax
import jax.numpy as jnp
from jax import lax
from jax.experimental import pallas as pl
from jax.experimental.pallas import tpu as pltpu

LANE = 128
SUBLANE = 8
MAX_TILE_ROWS = 1024   # (1024,128) f32 = 512 KiB/block; ~2-3 MiB double-buffered
NUM_CORES = 2          # leading "parallel" axis; harmless sequential pass on 1-TC chips


def _round_up(x, m):
    return (x + m - 1) // m * m


def _cdiv(a, b):
    return (a + b - 1) // b


def _min_sublane(dtype):
    """Minimum second-minor tile granularity: 8 (f32) / 16 (bf16) / 32 (int8)."""
    return SUBLANE * (4 // jnp.dtype(dtype).itemsize)


def _accumulate(pred_ref, target_ref, mask_ref, out_ref, *, row0, rows,
                chunk, nchunk, has_mask, apply_tail_mask):
    """Accumulate [sum(ld^2), sum(ld), count] over one (tile_rows, LANE) block."""

    def body(j, carry):
        s_sq, s_ld, s_cnt = carry
        r0 = pl.multiple_of(j * chunk, chunk)
        p = pred_ref[pl.ds(r0, chunk), :].astype(jnp.float32)
        t = target_ref[pl.ds(r0, chunk), :].astype(jnp.float32)
        if has_mask:
            # Explicit mask: PyTorch uses it verbatim (pred[mask]), no target>0 test.
            valid = mask_ref[pl.ds(r0, chunk), :].astype(jnp.int32) != 0
        else:
            valid = t > 0.0
        if apply_tail_mask:
            rid = row0 + r0 + lax.broadcasted_iota(jnp.int32, (chunk, LANE), 0)
            valid = jnp.logical_and(valid, rid < rows)
        # Two logs keep transcendental work on the EUP slot and match reference numerics.
        ld = jnp.where(valid, jnp.log(p + 1e-8) - jnp.log(t + 1e-8), 0.0)
        return (s_sq + ld * ld, s_ld + ld, s_cnt + valid.astype(jnp.float32))

    zeros = jnp.zeros((chunk, LANE), jnp.float32)
    s_sq, s_ld, s_cnt = lax.fori_loop(0, nchunk, body, (zeros, zeros, zeros),
                                      unroll=min(8, nchunk))

    def fold(x):  # (chunk, LANE) -> (SUBLANE, LANE) with VPU adds only
        return x if chunk == SUBLANE else x.reshape(-1, SUBLANE, LANE).sum(axis=0)

    out_ref[0, 0, :, :] += fold(s_sq)
    out_ref[0, 1, :, :] += fold(s_ld)
    out_ref[0, 2, :, :] += fold(s_cnt)


def _silog_partial_kernel(*refs, rows, tile_rows, nblk_per_core, chunk,
                          needs_mask, has_mask):
    """Per-core partial sums of [log_diff^2, log_diff, count].

    Output block: (1, 3, 8, 128) f32, revisited across the streaming axis.
    """
    if has_mask:
        pred_ref, target_ref, mask_ref, out_ref = refs
    else:
        pred_ref, target_ref, out_ref = refs
        mask_ref = None

    c = pl.program_id(0)   # core / outer parallel axis
    i = pl.program_id(1)   # streaming (reduction) axis

    @pl.when(i == 0)
    def _():
        out_ref[...] = jnp.zeros_like(out_ref)

    nchunk = tile_rows // chunk
    row0 = (c * nblk_per_core + i) * tile_rows   # virtual (unclamped) first row

    acc = functools.partial(
        _accumulate, pred_ref, target_ref, mask_ref, out_ref,
        row0=row0, rows=rows, chunk=chunk, nchunk=nchunk, has_mask=has_mask)

    if not needs_mask:               # static: mask code not emitted at all
        acc(apply_tail_mask=False)
    else:
        in_bounds = row0 + tile_rows <= rows

        @pl.when(in_bounds)          # interior blocks: mask-free fast path
        def _():
            acc(apply_tail_mask=False)

        @pl.when(jnp.logical_not(in_bounds))   # tail / out-of-range blocks only
        def _():
            acc(apply_tail_mask=True)


def silog_loss(pred, target, mask=None, variance_focus=0.5):
    """SILog loss. pred/target: any shape (e.g. (B,1,H,W)); mask optional."""
    pred_f = pred.reshape(-1)
    target_f = target.reshape(-1)
    has_mask = mask is not None

    inputs = [pred_f, target_f]
    if has_mask:
        mask_f = mask.reshape(-1)
        if mask_f.dtype == jnp.bool_:
            # TODO(synk): stream bool directly once i1 memrefs are reliably lowered;
            # the int8 cast is ~1 B/elem vs. rewriting target (4 B/elem read+write).
            mask_f = mask_f.astype(jnp.int8)
        inputs.append(mask_f)

    n = pred_f.shape[0]
    if n == 0:
        return jnp.float32(jnp.nan)          # mean of empty selection (torch: NaN)
    if n % LANE != 0:
        # TODO(synk): handle the <128-element flat tail with a ragged 1-D block +
        # element-index mask to avoid this pad copy (rare for depth-map shapes).
        padn = LANE - n % LANE
        # Zero padding is excluded either via target==0 (no mask) or mask==0.
        inputs = [jnp.pad(x, (0, padn)) for x in inputs]

    rows = inputs[0].shape[0] // LANE
    inputs = [x.reshape(rows, LANE) for x in inputs]     # layout-compatible, free

    # Dtype-aware sublane granularity (max over all streamed inputs).
    chunk = max(_min_sublane(x.dtype) for x in inputs)

    # Workload-derived tiling: num_cores * nblk_per_core * tile_rows covers
    # `rows` with < chunk rows of slack per block, so there is no fully-masked
    # duplicate block and typically needs_mask == False.
    num_cores = NUM_CORES if rows >= NUM_CORES * chunk else 1
    nblk_per_core = max(1, _cdiv(rows, num_cores * MAX_TILE_ROWS))
    tile_rows = _round_up(_cdiv(rows, num_cores * nblk_per_core), chunk)
    nblk_real = _cdiv(rows, tile_rows)
    needs_mask = num_cores * nblk_per_core * tile_rows != rows

    def block_map(c, i):
        # Clamp so a (rare) fully-out-of-range virtual block still DMAs
        # in-bounds data; its rows are excluded by the tail mask.
        blk = jnp.minimum(c * nblk_per_core + i, nblk_real - 1)
        return (blk, 0)

    data_spec = pl.BlockSpec((tile_rows, LANE), block_map)
    in_specs = [data_spec] * len(inputs)

    kernel = functools.partial(
        _silog_partial_kernel, rows=rows, tile_rows=tile_rows,
        nblk_per_core=nblk_per_core, chunk=chunk,
        needs_mask=needs_mask, has_mask=has_mask)

    out_bytes = num_cores * 3 * SUBLANE * LANE * 4
    cost = pl.CostEstimate(
        flops=10 * rows * LANE,
        transcendentals=2 * rows * LANE,
        bytes_accessed=sum(int(x.size) * x.dtype.itemsize for x in inputs) + out_bytes)

    partials = pl.pallas_call(
        kernel,
        out_shape=jax.ShapeDtypeStruct((num_cores, 3, SUBLANE, LANE), jnp.float32),
        grid_spec=pltpu.PrefetchScalarGridSpec(
            num_scalar_prefetch=0,
            grid=(num_cores, nblk_per_core),
            in_specs=in_specs,
            out_specs=pl.BlockSpec((1, 3, SUBLANE, LANE),
                                   lambda c, i: (c, 0, 0, 0)),
        ),
        compiler_params=pltpu.CompilerParams(
            dimension_semantics=("parallel", "arbitrary")),
        cost_estimate=cost,
    )(*inputs)

    sums = jnp.sum(partials, axis=(0, 2, 3))          # tiny (3,) epilogue reduce
    sum_sq, sum_ld, count = sums[0], sums[1], sums[2]
    # Note: count == 0 yields NaN, same as the PyTorch mean-of-empty behaviour.
    mean_sq = sum_sq / count
    mean_ld = sum_ld / count
    return mean_sq - variance_focus * mean_ld * mean_ld


def _silog_loss_ref(pred, target, mask=None, variance_focus=0.5):
    """Pure-JAX reference mirroring the PyTorch forward."""
    pred = pred.reshape(-1).astype(jnp.float32)
    target = target.reshape(-1).astype(jnp.float32)
    valid = (target > 0.0) if mask is None else mask.reshape(-1)
    log_diff = jnp.where(valid, jnp.log(pred + 1e-8) - jnp.log(target + 1e-8), 0.0)
    cnt = jnp.sum(valid.astype(jnp.float32))
    m2 = jnp.sum(log_diff ** 2) / cnt
    m1 = jnp.sum(log_diff) / cnt
    return m2 - variance_focus * m1 ** 2


if __name__ == "__main__":
    key = jax.random.PRNGKey(0)
    k1, k2, k3 = jax.random.split(key, 3)

    # Small (B, 1, H, W) case (rows=4): exercises the ragged tail-mask path.
    B, C, H, W = 2, 1, 16, 16
    pred = jax.random.uniform(k1, (B, C, H, W), jnp.float32, minval=0.1, maxval=10.0)
    target = jax.random.uniform(k2, (B, C, H, W), jnp.float32, minval=0.1, maxval=10.0)
    target = jnp.where(jax.random.bernoulli(k3, 0.3, (B, C, H, W)), 0.0, target)

    loss = jax.block_until_ready(silog_loss(pred, target, variance_focus=0.5))
    ref = jax.block_until_ready(_silog_loss_ref(pred, target, variance_focus=0.5))
    assert jnp.allclose(loss, ref, rtol=1e-4, atol=1e-6), (loss, ref)

    # Larger case (rows=2560): 2-way core split, exact coverage, no mask path.
    k4, k5, k6 = jax.random.split(jax.random.PRNGKey(1), 3)
    B2, H2, W2 = 2, 512, 320
    pred2 = jax.random.uniform(k4, (B2, 1, H2, W2), jnp.float32, minval=0.1, maxval=10.0)
    target2 = jax.random.uniform(k5, (B2, 1, H2, W2), jnp.float32, minval=0.1, maxval=10.0)
    target2 = jnp.where(jax.random.bernoulli(k6, 0.3, (B2, 1, H2, W2)), 0.0, target2)

    loss2 = jax.block_until_ready(silog_loss(pred2, target2, variance_focus=0.85))
    ref2 = jax.block_until_ready(_silog_loss_ref(pred2, target2, variance_focus=0.85))
    assert jnp.allclose(loss2, ref2, rtol=1e-4, atol=1e-6), (loss2, ref2)

    # Explicit-mask case: mask streamed as a third (int8) kernel input.
    k7, k8, k9 = jax.random.split(jax.random.PRNGKey(2), 3)
    B3, H3, W3 = 2, 32, 64
    pred3 = jax.random.uniform(k7, (B3, 1, H3, W3), jnp.float32, minval=0.1, maxval=10.0)
    target3 = jax.random.uniform(k8, (B3, 1, H3, W3), jnp.float32, minval=0.1, maxval=10.0)
    mask3 = jax.random.bernoulli(k9, 0.6, (B3, 1, H3, W3))

    loss3 = jax.block_until_ready(silog_loss(pred3, target3, mask=mask3,
                                             variance_focus=0.85))
    ref3 = jax.block_until_ready(_silog_loss_ref(pred3, target3, mask=mask3,
                                                 variance_focus=0.85))
    assert jnp.allclose(loss3, ref3, rtol=1e-4, atol=1e-6), (loss3, ref3)

    print("KERNEL_OK")
</pallas_src>

<mosaic_0001>
module attributes {stable_mosaic.version = 11 : i64} {
  func.func @_silog_partial_kernel(%arg0: i32, %arg1: i32, %arg2: memref<8x128xf32, #tpu.memory_space<vmem>>, %arg3: memref<8x128xf32, #tpu.memory_space<vmem>>, %arg4: memref<1x3x8x128xf32, #tpu.memory_space<vmem>>) attributes {dimension_semantics = [#tpu.dimension_semantics<parallel>, #tpu.dimension_semantics<arbitrary>], iteration_bounds = array<i64: 1, 1>, scalar_prefetch = 0 : i64, scratch_operands = 0 : i64, tpu.core_type = #tpu.core_type<tc>, window_params = [{transform_indices = @transform_0, window_bounds = array<i64: 8, 128>}, {transform_indices = @transform_1, window_bounds = array<i64: 8, 128>}, {transform_indices = @transform_2, window_bounds = array<i64: 1, 3, 8, 128>}]} {
    %c0_i32 = arith.constant 0 : i32
    %0 = arith.cmpi eq, %arg1, %c0_i32 : i32
    %1 = arith.extui %0 : i1 to i32
    %c0_i32_0 = arith.constant 0 : i32
    %2 = arith.cmpi ne, %1, %c0_i32_0 : i32
    scf.if %2 {
      %cst = arith.constant 0.000000e+00 : f32
      %13 = vector.broadcast %cst : f32 to vector<1x3x8x128xf32>
      %c0 = arith.constant 0 : index
      %c0_4 = arith.constant 0 : index
      %c0_5 = arith.constant 0 : index
      %c0_6 = arith.constant 0 : index
      %14 = vector.load %arg4[%c0, %c0_4, %c0_5, %c0_6] : memref<1x3x8x128xf32, #tpu.memory_space<vmem>>, vector<1x3x8x128xf32>
      tpu.vector_store %arg4[%c0, %c0_4, %c0_5, %c0_6], %13 {strides = array<i32>} : memref<1x3x8x128xf32, #tpu.memory_space<vmem>>, vector<1x3x8x128xf32>,
    } else {
    }
    %c1_i32 = arith.constant 1 : i32
    %3 = arith.muli %arg0, %c1_i32 : i32
    %4 = arith.addi %3, %arg1 : i32
    %c8_i32 = arith.constant 8 : i32
    %5 = arith.muli %4, %c8_i32 : i32
    %c8_i32_1 = arith.constant 8 : i32
    %6 = arith.addi %5, %c8_i32_1 : i32
    %c4_i32 = arith.constant 4 : i32
    %7 = arith.cmpi sle, %6, %c4_i32 : i32
    %8 = arith.extui %7 : i1 to i32
    %c0_i32_2 = arith.constant 0 : i32
    %9 = arith.cmpi ne, %8, %c0_i32_2 : i32
    scf.if %9 {
      %cst = arith.constant 0.000000e+00 : f32
      %13 = vector.broadcast %cst : f32 to vector<8x128xf32>
      %c0_i32_4 = arith.constant 0 : i32
      %c8_i32_5 = arith.constant 8 : i32
      %14 = arith.muli %c0_i32_4, %c8_i32_5 : i32
      %15 = tpu.assume_multiple %14, 8 : i32
      %16 = arith.index_cast %15 : i32 to index
      %c0 = arith.constant 0 : index
      %17 = vector.load %arg2[%16, %c0] : memref<8x128xf32, #tpu.memory_space<vmem>>, vector<8x128xf32>
      %18 = arith.index_cast %15 : i32 to index
      %c0_6 = arith.constant 0 : index
      %19 = vector.load %arg3[%18, %c0_6] : memref<8x128xf32, #tpu.memory_space<vmem>>, vector<8x128xf32>
      %cst_7 = arith.constant 0.000000e+00 : f32
      %20 = vector.broadcast %cst_7 : f32 to vector<8x128xf32>
      %21 = arith.cmpf ogt, %19, %20 : vector<8x128xf32>
      %cst_8 = arith.constant 9.99999993E-9 : f32
      %22 = vector.broadcast %cst_8 : f32 to vector<8x128xf32>
      %23 = arith.addf %17, %22 : vector<8x128xf32>
      %24 = math.log %23 : vector<8x128xf32>
      %cst_9 = arith.constant 9.99999993E-9 : f32
      %25 = vector.broadcast %cst_9 : f32 to vector<8x128xf32>
      %26 = arith.addf %19, %25 : vector<8x128xf32>
      %27 = math.log %26 : vector<8x128xf32>
      %28 = arith.subf %24, %27 : vector<8x128xf32>
      %cst_10 = arith.constant 0.000000e+00 : f32
      %29 = vector.broadcast %cst_10 : f32 to vector<8x128xf32>
      %30 = arith.select %21, %28, %29 : vector<8x128xi1>, vector<8x128xf32>
      %31 = arith.mulf %30, %30 : vector<8x128xf32>
      %32 = arith.addf %13, %31 : vector<8x128xf32>
      %33 = arith.addf %13, %30 : vector<8x128xf32>
      %34 = arith.extui %21 : vector<8x128xi1> to vector<8x128xi32>
      %35 = arith.sitofp %34 : vector<8x128xi32> to vector<8x128xf32>
      %36 = arith.addf %13, %35 : vector<8x128xf32>
      %c1_i32_11 = arith.constant 1 : i32
      %c0_12 = arith.constant 0 : index
      %c0_13 = arith.constant 0 : index
      %c0_14 = arith.constant 0 : index
      %c0_15 = arith.constant 0 : index
      %37 = vector.load %arg4[%c0_12, %c0_13, %c0_14, %c0_15] : memref<1x3x8x128xf32, #tpu.memory_space<vmem>>, vector<1x1x8x128xf32>
      %38 = vector.shape_cast %37 : vector<1x1x8x128xf32> to vector<8x128xf32>
      %39 = arith.addf %38, %32 : vector<8x128xf32>
      %c0_16 = arith.constant 0 : index
      %c0_17 = arith.constant 0 : index
      %c0_18 = arith.constant 0 : index
      %c0_19 = arith.constant 0 : index
      %40 = vector.load %arg4[%c0_16, %c0_17, %c0_18, %c0_19] : memref<1x3x8x128xf32, #tpu.memory_space<vmem>>, vector<1x1x8x128xf32>
      %41 = vector.shape_cast %40 : vector<1x1x8x128xf32> to vector<8x128xf32>
      %42 = vector.shape_cast %39 : vector<8x128xf32> to vector<1x1x8x128xf32>
      tpu.vector_store %arg4[%c0_16, %c0_17, %c0_18, %c0_19], %42 {strides = array<i32>} : memref<1x3x8x128xf32, #tpu.memory_space<vmem>>, vector<1x1x8x128xf32>,
      %c0_20 = arith.constant 0 : index
      %c1 = arith.constant 1 : index
      %c0_21 = arith.constant 0 : index
      %c0_22 = arith.constant 0 : index
      %43 = vector.load %arg4[%c0_20, %c1, %c0_21, %c0_22] : memref<1x3x8x128xf32, #tpu.memory_space<vmem>>, vector<1x1x8x128xf32>
      %44 = vector.shape_cast %43 : vector<1x1x8x128xf32> to vector<8x128xf32>
      %45 = arith.addf %44, %33 : vector<8x128xf32>
      %c0_23 = arith.constant 0 : index
      %c1_24 = arith.constant 1 : index
      %c0_25 = arith.constant 0 : index
      %c0_26 = arith.constant 0 : index
      %46 = vector.load %arg4[%c0_23, %c1_24, %c0_25, %c0_26] : memref<1x3x8x128xf32, #tpu.memory_space<vmem>>, vector<1x1x8x128xf32>
      %47 = vector.shape_cast %46 : vector<1x1x8x128xf32> to vector<8x128xf32>
      %48 = vector.shape_cast %45 : vector<8x128xf32> to vector<1x1x8x128xf32>
      tpu.vector_store %arg4[%c0_23, %c1_24, %c0_25, %c0_26], %48 {strides = array<i32>} : memref<1x3x8x128xf32, #tpu.memory_space<vmem>>, vector<1x1x8x128xf32>,
      %c0_27 = arith.constant 0 : index
      %c2 = arith.constant 2 : index
      %c0_28 = arith.constant 0 : index
      %c0_29 = arith.constant 0 : index
      %49 = vector.load %arg4[%c0_27, %c2, %c0_28, %c0_29] : memref<1x3x8x128xf32, #tpu.memory_space<vmem>>, vector<1x1x8x128xf32>
      %50 = vector.shape_cast %49 : vector<1x1x8x128xf32> to vector<8x128xf32>
      %51 = arith.addf %50, %36 : vector<8x128xf32>
      %c0_30 = arith.constant 0 : index
      %c2_31 = arith.constant 2 : index
      %c0_32 = arith.constant 0 : index
      %c0_33 = arith.constant 0 : index
      %52 = vector.load %arg4[%c0_30, %c2_31, %c0_32, %c0_33] : memref<1x3x8x128xf32, #tpu.memory_space<vmem>>, vector<1x1x8x128xf32>
      %53 = vector.shape_cast %52 : vector<1x1x8x128xf32> to vector<8x128xf32>
      %54 = vector.shape_cast %51 : vector<8x128xf32> to vector<1x1x8x128xf32>
      tpu.vector_store %arg4[%c0_30, %c2_31, %c0_32, %c0_33], %54 {strides = array<i32>} : memref<1x3x8x128xf32, #tpu.memory_space<vmem>>, vector<1x1x8x128xf32>,
    } else {
    }
    %true = arith.constant true
    %10 = arith.xori %7, %true : i1
    %11 = arith.extui %10 : i1 to i32
    %c0_i32_3 = arith.constant 0 : i32
    %12 = arith.cmpi ne, %11, %c0_i32_3 : i32
    scf.if %12 {
      %cst = arith.constant 0.000000e+00 : f32
      %13 = vector.broadcast %cst : f32 to vector<8x128xf32>
      %c0_i32_4 = arith.constant 0 : i32
      %c8_i32_5 = arith.constant 8 : i32
      %14 = arith.muli %c0_i32_4, %c8_i32_5 : i32
      %15 = tpu.assume_multiple %14, 8 : i32
      %16 = arith.index_cast %15 : i32 to index
      %c0 = arith.constant 0 : index
      %17 = vector.load %arg2[%16, %c0] : memref<8x128xf32, #tpu.memory_space<vmem>>, vector<8x128xf32>
      %18 = arith.index_cast %15 : i32 to index
      %c0_6 = arith.constant 0 : index
      %19 = vector.load %arg3[%18, %c0_6] : memref<8x128xf32, #tpu.memory_space<vmem>>, vector<8x128xf32>
      %cst_7 = arith.constant 0.000000e+00 : f32
      %20 = vector.broadcast %cst_7 : f32 to vector<8x128xf32>
      %21 = arith.cmpf ogt, %19, %20 : vector<8x128xf32>
      %22 = arith.addi %5, %15 : i32
      %23 = tpu.iota {dimensions = array<i32: 0>} : vector<8x128xi32>
      %24 = vector.broadcast %22 : i32 to vector<8x128xi32>
      %25 = arith.addi %24, %23 : vector<8x128xi32>
      %c4_i32_8 = arith.constant 4 : i32
      %26 = vector.broadcast %c4_i32_8 : i32 to vector<8x128xi32>
      %27 = arith.cmpi slt, %25, %26 : vector<8x128xi32>
      %28 = arith.andi %21, %27 : vector<8x128xi1>
      %cst_9 = arith.constant 9.99999993E-9 : f32
      %29 = vector.broadcast %cst_9 : f32 to vector<8x128xf32>
      %30 = arith.addf %17, %29 : vector<8x128xf32>
      %31 = math.log %30 : vector<8x128xf32>
      %cst_10 = arith.constant 9.99999993E-9 : f32
      %32 = vector.broadcast %cst_10 : f32 to vector<8x128xf32>
      %33 = arith.addf %19, %32 : vector<8x128xf32>
      %34 = math.log %33 : vector<8x128xf32>
      %35 = arith.subf %31, %34 : vector<8x128xf32>
      %cst_11 = arith.constant 0.000000e+00 : f32
      %36 = vector.broadcast %cst_11 : f32 to vector<8x128xf32>
      %37 = arith.select %28, %35, %36 : vector<8x128xi1>, vector<8x128xf32>
      %38 = arith.mulf %37, %37 : vector<8x128xf32>
      %39 = arith.addf %13, %38 : vector<8x128xf32>
      %40 = arith.addf %13, %37 : vector<8x128xf32>
      %41 = arith.extui %28 : vector<8x128xi1> to vector<8x128xi32>
      %42 = arith.sitofp %41 : vector<8x128xi32> to vector<8x128xf32>
      %43 = arith.addf %13, %42 : vector<8x128xf32>
      %c1_i32_12 = arith.constant 1 : i32
      %c0_13 = arith.constant 0 : index
      %c0_14 = arith.constant 0 : index
      %c0_15 = arith.constant 0 : index
      %c0_16 = arith.constant 0 : index
      %44 = vector.load %arg4[%c0_13, %c0_14, %c0_15, %c0_16] : memref<1x3x8x128xf32, #tpu.memory_space<vmem>>, vector<1x1x8x128xf32>
      %45 = vector.shape_cast %44 : vector<1x1x8x128xf32> to vector<8x128xf32>
      %46 = arith.addf %45, %39 : vector<8x128xf32>
      %c0_17 = arith.constant 0 : index
      %c0_18 = arith.constant 0 : index
      %c0_19 = arith.constant 0 : index
      %c0_20 = arith.constant 0 : index
      %47 = vector.load %arg4[%c0_17, %c0_18, %c0_19, %c0_20] : memref<1x3x8x128xf32, #tpu.memory_space<vmem>>, vector<1x1x8x128xf32>
      %48 = vector.shape_cast %47 : vector<1x1x8x128xf32> to vector<8x128xf32>
      %49 = vector.shape_cast %46 : vector<8x128xf32> to vector<1x1x8x128xf32>
      tpu.vector_store %arg4[%c0_17, %c0_18, %c0_19, %c0_20], %49 {strides = array<i32>} : memref<1x3x8x128xf32, #tpu.memory_space<vmem>>, vector<1x1x8x128xf32>,
      %c0_21 = arith.constant 0 : index
      %c1 = arith.constant 1 : index
      %c0_22 = arith.constant 0 : index
      %c0_23 = arith.constant 0 : index
      %50 = vector.load %arg4[%c0_21, %c1, %c0_22, %c0_23] : memref<1x3x8x128xf32, #tpu.memory_space<vmem>>, vector<1x1x8x128xf32>
      %51 = vector.shape_cast %50 : vector<1x1x8x128xf32> to vector<8x128xf32>
      %52 = arith.addf %51, %40 : vector<8x128xf32>
      %c0_24 = arith.constant 0 : index
      %c1_25 = arith.constant 1 : index
      %c0_26 = arith.constant 0 : index
      %c0_27 = arith.constant 0 : index
      %53 = vector.load %arg4[%c0_24, %c1_25, %c0_26, %c0_27] : memref<1x3x8x128xf32, #tpu.memory_space<vmem>>, vector<1x1x8x128xf32>
      %54 = vector.shape_cast %53 : vector<1x1x8x128xf32> to vector<8x128xf32>
      %55 = vector.shape_cast %52 : vector<8x128xf32> to vector<1x1x8x128xf32>
      tpu.vector_store %arg4[%c0_24, %c1_25, %c0_26, %c0_27], %55 {strides = array<i32>} : memref<1x3x8x128xf32, #tpu.memory_space<vmem>>, vector<1x1x8x128xf32>,
      %c0_28 = arith.constant 0 : index
      %c2 = arith.constant 2 : index
      %c0_29 = arith.constant 0 : index
      %c0_30 = arith.constant 0 : index
      %56 = vector.load %arg4[%c0_28, %c2, %c0_29, %c0_30] : memref<1x3x8x128xf32, #tpu.memory_space<vmem>>, vector<1x1x8x128xf32>
      %57 = vector.shape_cast %56 : vector<1x1x8x128xf32> to vector<8x128xf32>
      %58 = arith.addf %57, %43 : vector<8x128xf32>
      %c0_31 = arith.constant 0 : index
      %c2_32 = arith.constant 2 : index
      %c0_33 = arith.constant 0 : index
      %c0_34 = arith.constant 0 : index
      %59 = vector.load %arg4[%c0_31, %c2_32, %c0_33, %c0_34] : memref<1x3x8x128xf32, #tpu.memory_space<vmem>>, vector<1x1x8x128xf32>
      %60 = vector.shape_cast %59 : vector<1x1x8x128xf32> to vector<8x128xf32>
      %61 = vector.shape_cast %58 : vector<8x128xf32> to vector<1x1x8x128xf32>
      tpu.vector_store %arg4[%c0_31, %c2_32, %c0_33, %c0_34], %61 {strides = array<i32>} : memref<1x3x8x128xf32, #tpu.memory_space<vmem>>, vector<1x1x8x128xf32>,
    } else {
    }
    return
  }
  func.func @transform_0(%arg0: i32, %arg1: i32) -> (i32, i32) {
    %c1_i32 = arith.constant 1 : i32
    %0 = arith.muli %arg0, %c1_i32 : i32
    %1 = arith.addi %0, %arg1 : i32
    %c0_i32 = arith.constant 0 : i32
    %2 = arith.minsi %1, %c0_i32 : i32
    %c0_i32_0 = arith.constant 0 : i32
    %c0_i32_1 = arith.constant 0 : i32
    return %2, %c0_i32_0 : i32, i32
  }
  func.func @transform_1(%arg0: i32, %arg1: i32) -> (i32, i32) {
    %c1_i32 = arith.constant 1 : i32
    %0 = arith.muli %arg0, %c1_i32 : i32
    %1 = arith.addi %0, %arg1 : i32
    %c0_i32 = arith.constant 0 : i32
    %2 = arith.minsi %1, %c0_i32 : i32
    %c0_i32_0 = arith.constant 0 : i32
    %c0_i32_1 = arith.constant 0 : i32
    return %2, %c0_i32_0 : i32, i32
  }
  func.func @transform_2(%arg0: i32, %arg1: i32) -> (i32, i32, i32, i32) {
    %c0_i32 = arith.constant 0 : i32
    %c0_i32_0 = arith.constant 0 : i32
    %c0_i32_1 = arith.constant 0 : i32
    %c0_i32_2 = arith.constant 0 : i32
    return %arg0, %c0_i32, %c0_i32_0, %c0_i32_1 : i32, i32, i32, i32
  }
}

</mosaic_0001>

<llo_original>
// kernel: tpu_custom_call.1
$region0: #{tpu_custom_call.1}
  #allocation0 [shape = 'u32[]', space=smem, size = 0x4, offset = 0x4, fixed_abs, tag = 'smem constant byte address 0x4 - core index']
  #allocation1 [shape = 'u32[144,128]{1,0:T(1,128)}', space=vmem, size = 0x12000, scoped, tag = 'internal scratch']
  %s0 = inlined_call_operand.hbm [shape: f32[4,128], index: 0, kind: input, shape index: {}]
  %s1 = inlined_call_operand.hbm [shape: f32[4,128], index: 1, kind: input, shape index: {}]
  %s2 = inlined_call_operand.hbm [shape: f32[1,3,8,128], index: 2, kind: output, shape index: {}]
  %s3 = sld [smem:[#allocation0]]
  $region38: #{tpu_custom_call.1} parent=0
    _
  %s5 = ssub.s32 1, %s3
  %s6 = scalar_select 0, %s5, %s3
  $region1: #{tpu_custom_call.1} parent=0
    #allocation2 [shape = 'u8[4096]{0}', space=vmem, size = 0x1000, scoped, tag = 'input window, operand 0, single buffered']
    #allocation3 [shape = 's32[1]{0}', space=sflag, size = 0x4, scoped, tag = 'scoped memory for tpu_custom_call.1']
    #allocation4 [shape = 's32[1]{0}', space=sflag, size = 0x4, scoped, tag = 'scoped memory for tpu_custom_call.1']
    #allocation5 [shape = 'u8[4096]{0}', space=vmem, size = 0x1000, scoped, tag = 'input window, operand 1, single buffered']
    #allocation6 [shape = 's32[1]{0}', space=sflag, size = 0x4, scoped, tag = 'scoped memory for tpu_custom_call.1']
    #allocation7 [shape = 'u8[12288]{0}', space=vmem, size = 0x3000, scoped, tag = 'output window, operand 0, single buffered']
    %7 = vsyncpa [#allocation3], 0
    %8 = vsyncpa [#allocation6], 0
    %9 = vsyncpa [#allocation4], 0
    // Predicated region
    $region2: #{tpu_custom_call.1} parent=1 // pred_check
      _
    $region3: #{tpu_custom_call.1} parent=1 // pred_check_branch
      %11 = sbr.rel (0) target = $region5
    $region4: #{tpu_custom_call.1} parent=1 // pred_region
      %s12 = sadd.s32 0, 0
      %p13 = scmp.lt.s32.totalorder %s12, 0
      %s14 = scalar_select %p13, %s12, 0
      %s15 = smul.u32 2, %s14
      %s16 = ssub.s32 1, %s15
      %s17 = smul.u32 64, %s16
      %s19 = ssub.s32 128, %s17
      %20 = vsyncadd [#allocation3], %s19
      %p21 = scmp.ne.s32.totalorder 0, %s17
      %s22 = smul.addr %s15, 64
      %s23 = scalar_lea.hbm %s0, %s22
      %s24 = smul.u32 4, %s16
      %s25 = sshll.u32 [#allocation2], 4
      %s26 = int_to_ptr.vmem [resolvable:$true] %s25
      %s27 = sshll.u32 %s24, 4
      %31 = dma.hbm_to_vmem [thread:$0]  (%p21), %s23, %s27, %s26, [#allocation3], 64, 64, 4
    $region5: #{tpu_custom_call.1} parent=1 // pred_fallthru
      _
    // Predicated region
    $region6: #{tpu_custom_call.1} parent=1 // pred_check
      _
    $region7: #{tpu_custom_call.1} parent=1 // pred_check_branch
      %33 = sbr.rel (0) target = $region9
    $region8: #{tpu_custom_call.1} parent=1 // pred_region
      %s34 = sadd.s32 0, 0
      %p35 = scmp.lt.s32.totalorder %s34, 0
      %s36 = scalar_select %p35, %s34, 0
      %s37 = smul.u32 2, %s36
      %s38 = ssub.s32 1, %s37
      %s39 = smul.u32 64, %s38
      %s41 = ssub.s32 128, %s39
      %42 = vsyncadd [#allocation6], %s41
      %p43 = scmp.ne.s32.totalorder 0, %s39
      %s44 = smul.addr %s37, 64
      %s45 = scalar_lea.hbm %s1, %s44
      %s46 = smul.u32 4, %s38
      %s47 = sshll.u32 [#allocation5], 4
      %s48 = int_to_ptr.vmem [resolvable:$true] %s47
      %s49 = sshll.u32 %s46, 4
      %53 = dma.hbm_to_vmem [thread:$0]  (%p43), %s45, %s49, %s48, [#allocation6], 64, 64, 4
    $region9: #{tpu_custom_call.1} parent=1 // pred_fallthru
      _
    // Predicated region
    $region10: #{tpu_custom_call.1} parent=1 // pred_check
      _
    $region11: #{tpu_custom_call.1} parent=1 // pred_check_branch
      %55 = sbr.rel (0) target = $region13
    $region12: #{tpu_custom_call.1} parent=1 // pred_region
      %56 = dma.done [#allocation3], 128
    $region13: #{tpu_custom_call.1} parent=1 // pred_fallthru
      _
    // Predicated region
    $region14: #{tpu_custom_call.1} parent=1 // pred_check
      _
    $region15: #{tpu_custom_call.1} parent=1 // pred_check_branch
      %58 = sbr.rel (0) target = $region17
    $region16: #{tpu_custom_call.1} parent=1 // pred_region
      %59 = dma.done [#allocation6], 128
    $region17: #{tpu_custom_call.1} parent=1 // pred_fallthru
      _
    %s60 = sadd.s32 0, 0
    %p61 = scmp.lt.s32.totalorder %s60, 0
    %s62 = scalar_select %p61, %s60, 0
    %s63 = smul.u32 2, %s62
    %s64 = ssub.s32 1, %s63
    %s65 = smul.u32 64, %s64
    %s66 = sadd.s32 0, 0
    %p67 = scmp.lt.s32.totalorder %s66, 0
    %s68 = scalar_select %p67, %s66, 0
    %s69 = smul.u32 2, %s68
    %s70 = ssub.s32 1, %s69
    %s71 = smul.u32 64, %s70
    %p72 = scmp.eq.s32.totalorder 0, 0
    // Predicated region
    $region18: #{tpu_custom_call.1} parent=1 // pred_check
      %p73 = pneg %p72
    $region19: #{tpu_custom_call.1} parent=1 // pred_check_branch
      %75 = sbr.rel (%p73) target = $region21
    $region20: #{tpu_custom_call.1} parent=1 // pred_region
      %76 = vst [vmem:[#allocation7] sm:$0xff] 0.0
      %77 = vst [vmem:[#allocation7 + $0x8] sm:$0xff] 0.0
      %78 = vst [vmem:[#allocation7 + $0x10] sm:$0xff] 0.0
    $region21: #{tpu_custom_call.1} parent=1 // pred_fallthru
      _
    %s79 = sadd.s32 0, 0
    %s80 = smul.u32 %s79, 8
    %s81 = sadd.s32 %s80, 8
    %p82 = scmp.le.s32.totalorder %s81, 4
    // Predicated region
    $region22: #{tpu_custom_call.1} parent=1 // pred_check
      %p83 = pneg %p82
    $region23: #{tpu_custom_call.1} parent=1 // pred_check_branch
      %85 = sbr.rel (%p83) target = $region25
    $region24: #{tpu_custom_call.1} parent=1 // pred_region
      %v86 = vld [vmem:[#allocation2] sm:$0xff]
      %v87 = vld [vmem:[#allocation5] sm:$0xff]
      %vm88 = vcmp.gt.f32.partialorder %v87, 0.0
      %v89 = vadd.f32 %v86, 1e-08
      %v90 = vlog2.pop %v89
      %v91 = vmul.f32 %v90, 0.6931472
      %v92 = vadd.f32 %v87, 1e-08
      %v93 = vlog2.pop %v92
      %v94 = vmul.f32 %v93, 0.6931472
      %v95 = vsub.f32 %v91, %v94
      %v96 = vsel %vm88, %v95, 0.0
      %v97 = vmul.f32 %v96, %v96
      %v98 = vadd.f32 %v97, 0.0
      %v99 = vadd.f32 %v96, 0.0
      %v100 = vsel %vm88, 1, 0
      %v101 = vcvt.s32.f32 %v100
      %v102 = vadd.f32 %v101, 0.0
      %v103 = vld [vmem:[#allocation7] sm:$0xff]
      %v104 = vadd.f32 %v103, %v98
      %105 = vst [vmem:[#allocation7] sm:$0xff] %v104
      %s106 = scalar_lea.vmem [#allocation7], 8
      %v107 = vld [vmem:[%s106] sm:$0xff]
      %v108 = vadd.f32 %v107, %v99
      %109 = vst [vmem:[%s106] sm:$0xff] %v108
      %s110 = scalar_lea.vmem [#allocation7], 16
      %v111 = vld [vmem:[%s110] sm:$0xff]
      %v112 = vadd.f32 %v111, %v102
      %113 = vst [vmem:[%s110] sm:$0xff] %v112
    $region25: #{tpu_custom_call.1} parent=1 // pred_fallthru
      _
    %p114 = scmp.gt.s32.totalorder %s81, 4
    // Predicated region
    $region26: #{tpu_custom_call.1} parent=1 // pred_check
      %p115 = pneg %p114
    $region27: #{tpu_custom_call.1} parent=1 // pred_check_branch
      %117 = sbr.rel (%p115) target = $region29
    $region28: #{tpu_custom_call.1} parent=1 // pred_region
      %v118 = vld [vmem:[#allocation2] sm:$0xff]
      %v119 = vld [vmem:[#allocation5] sm:$0xff]
      %vm120 = vcmp.gt.f32.partialorder %v119, 0.0
      %s121 = sadd.s32 %s80, 0
      %v122 = vlaneseq
      %v123 = vshrl.u32 %v122, 7
      %v124 = vstv %s121
      %v125 = vadd.s32 %v124, %v123
      %vm126 = vcmp.lt.s32.totalorder %v125, 4
      %vm127 = vmand %vm120, %vm126
      %v128 = vadd.f32 %v118, 1e-08
      %v129 = vlog2.pop %v128
      %v130 = vmul.f32 %v129, 0.6931472
      %v131 = vadd.f32 %v119, 1e-08
      %v132 = vlog2.pop %v131
      %v133 = vmul.f32 %v132, 0.6931472
      %v134 = vsub.f32 %v130, %v133
      %v135 = vsel %vm127, %v134, 0.0
      %v136 = vmul.f32 %v135, %v135
      %v137 = vadd.f32 %v136, 0.0
      %v138 = vadd.f32 %v135, 0.0
      %v139 = vsel %vm127, 1, 0
      %v140 = vcvt.s32.f32 %v139
      %v141 = vadd.f32 %v140, 0.0
      %v142 = vld [vmem:[#allocation7] sm:$0xff]
      %v143 = vadd.f32 %v142, %v137
      %144 = vst [vmem:[#allocation7] sm:$0xff] %v143
      %s145 = scalar_lea.vmem [#allocation7], 8
      %v146 = vld [vmem:[%s145] sm:$0xff]
      %v147 = vadd.f32 %v146, %v138
      %148 = vst [vmem:[%s145] sm:$0xff] %v147
      %s149 = scalar_lea.vmem [#allocation7], 16
      %v150 = vld [vmem:[%s149] sm:$0xff]
      %v151 = vadd.f32 %v150, %v141
      %152 = vst [vmem:[%s149] sm:$0xff] %v151
    $region29: #{tpu_custom_call.1} parent=1 // pred_fallthru
      _
    // Predicated region
    $region30: #{tpu_custom_call.1} parent=1 // pred_check
      _
    $region31: #{tpu_custom_call.1} parent=1 // pred_check_branch
      %154 = sbr.rel (0) target = $region33
    $region32: #{tpu_custom_call.1} parent=1 // pred_region
      %s156 = ssub.s32 384, 384
      %157 = vsyncadd [#allocation4], %s156
      %s158 = sshll.u32 [#allocation7], 4
      %s159 = int_to_ptr.vmem [resolvable:$true] %s158
      %164 = dma.vmem_to_hbm [thread:$0]  %s159, 384, %s2, [#allocation4], 128, 128, 8
    $region33: #{tpu_custom_call.1} parent=1 // pred_fallthru
      _
    // Predicated region
    $region34: #{tpu_custom_call.1} parent=1 // pred_check
      _
    $region35: #{tpu_custom_call.1} parent=1 // pred_check_branch
      %166 = sbr.rel (0) target = $region37
    $region36: #{tpu_custom_call.1} parent=1 // pred_region
      %167 = dma.done [#allocation4], 384
    $region37: #{tpu_custom_call.1} parent=1 // pred_fallthru
      _
    %168 = vsyncpa [#allocation3], 1
    %169 = vsyncpa [#allocation6], 1
    %170 = vsyncpa [#allocation4], 1

</llo_original>
